<compile_context>
chip_gen: v7x
topology: tpu7x:2x2x1
jax: 0.10.0
libtpu: 0.0.40
codegen_flags: <defaults>
</compile_context>

<pallas_src>
import functools

import jax
import jax.numpy as jnp
from jax import lax
from jax.experimental import pallas as pl
from jax.experimental.pallas import tpu as pltpu


def _round_up(x, m):
    return ((x + m - 1) // m) * m


# ----------------------------------------------------------------------------
# Pallas kernel
# ----------------------------------------------------------------------------
def _closest_joint_kernel(pts_ref, joints_ref, gbig_ref, out_ref, *,
                          num_joints, chunk):
    """One tile of points: squared-dist -> argmin -> fused gather + affine.

    pts_ref:    (3, TN)  f32  query points, lane-dense (x/y/z on sublanes)
    joints_ref: (J, 3)   f32  observed joints (grid-invariant)
    gbig_ref:   (16, J)  f32  fused gather matrix (see _build_gbig)
    out_ref:    (3, TN)  f32  canonicalized points, lane-dense

    The tile is swept in `chunk`-lane sub-chunks by a fully unrolled
    fori_loop so every (J, chunk)/(16, chunk) intermediate stays well under
    the 64-vreg file -- no spill loads/stores through the vld/vst slots.
    """
    J = num_joints
    n_chunks = out_ref.shape[1] // chunk

    joints = joints_ref[...]                       # (J, 3)
    jx = joints[:, 0:1]                            # (J, 1)
    jy = joints[:, 1:2]
    jz = joints[:, 2:3]
    gbig = gbig_ref[...]                           # (16, J)

    # (J, 1) iota: broadcast against (J, chunk) where needed instead of
    # materializing a full-width int32 array.
    iota = lax.broadcasted_iota(jnp.int32, (J, 1), 0)

    def body(c, carry):
        off = pl.multiple_of(c * chunk, chunk)
        p = pts_ref[:, pl.ds(off, chunk)]          # (3, CH)
        x = p[0:1, :]                              # (1, CH) sublane slices
        y = p[1:2, :]
        z = p[2:3, :]

        # Squared distances on the VPU (broadcast FMAs; a K=3 contraction
        # does not deserve the MXU).  sqrt/clamp dropped: argmin-invariant.
        dx = x - jx
        dy = y - jy
        dz = z - jz
        d2 = dx * dx + dy * dy + dz * dz           # (J, CH)

        # argmin over joints (axis 0), first-index tie-break.
        min_d = jnp.min(d2, axis=0, keepdims=True)                      # (1, CH)
        idx = jnp.min(jnp.where(d2 <= min_d, iota, J), axis=0,
                      keepdims=True)                                    # (1, CH)
        onehot = (iota == idx).astype(jnp.float32)                      # (J, CH)

        # Row-gather of the selected joint's affine params on the MXU:
        #   w[r, n] = Gbig[r, idx_n]
        w = jnp.dot(gbig, onehot, preferred_element_type=jnp.float32)   # (16, CH)

        # Affine epilogue on the VPU: out = R @ p + T for the selected joint.
        # Row groups of Gbig were laid out so each 3-row slice of w stays
        # inside a single 8-sublane tile (no boundary-crossing slices).
        out_ref[:, pl.ds(off, chunk)] = (
            w[0:3, :] * x + w[3:6, :] * y + w[8:11, :] * z + w[11:14, :])
        return carry

    lax.fori_loop(0, n_chunks, body, 0, unroll=True)


# ----------------------------------------------------------------------------
# Wrappers
# ----------------------------------------------------------------------------
def _build_gbig(gs_joint):
    """(J, 4, 4) -> (16, J) fused gather matrix.

    Row layout (chosen so every 3-row slice of W = Gbig @ onehot stays inside
    one 8-sublane vreg tile):
        rows 0:3   -> R[:, 0]      rows 3:6   -> R[:, 1]
        rows 8:11  -> R[:, 2]      rows 11:14 -> T
        rows 6, 7, 14, 15 -> 0 (padding)
    Assumes Gs_joint[:, 3, :] == [0, 0, 0, 1] (rigid transforms).
    """
    J = gs_joint.shape[0]
    g = gs_joint[:, :3, :4].astype(jnp.float32)        # (J, 3, 4)
    gcols = jnp.transpose(g, (2, 1, 0))                # (4, 3, J): [b, i, j]
    gbig = jnp.zeros((16, J), jnp.float32)
    gbig = gbig.at[0:3].set(gcols[0])                  # R column 0
    gbig = gbig.at[3:6].set(gcols[1])                  # R column 1
    gbig = gbig.at[8:11].set(gcols[2])                 # R column 2
    gbig = gbig.at[11:14].set(gcols[3])                # T
    return gbig


def skeletal_motion_closest_joint_planar(pts_t, joints_obs, gs_joint, *,
                                         tile_n=4096, chunk=512):
    """Lane-dense entry point.

    pts_t:      (3, N)    f32  query points, channel-major
    joints_obs: (J, 3)    f32  observed joint positions
    gs_joint:   (J, 4, 4) f32  per-joint obs->canonical rigid transforms
    returns:    (3, N)    f32  canonicalized points

    Prefer this in a pipeline that keeps points channel-major: the (N, 3)
    wrapper below costs two extra HBM passes (transpose+pad in, slice+
    transpose out), comparable to the kernel's own ~24 B/point of traffic.
    """
    assert chunk % 128 == 0, "chunk must be a multiple of 128 (TPU lane width)"
    _, N = pts_t.shape
    J = joints_obs.shape[0]

    # Tile = multiple of chunk; clamp so the (parallel) grid has >= 2 balanced
    # blocks whenever N > chunk: v7x shards the parallel axis over its 2
    # TensorCores (irrelevant but harmless on v5e/v6e).
    tile_n = _round_up(max(tile_n, chunk), chunk)
    tile_n = max(chunk, min(tile_n, _round_up(pl.cdiv(N, 2), chunk)))
    n_blocks = pl.cdiv(N, tile_n)
    n_pad = n_blocks * tile_n
    assert tile_n % 128 == 0

    pts_pad = pts_t.astype(jnp.float32)
    if n_pad != N:
        # Padded tail lanes (zero points) produce valid-but-meaningless
        # outputs that are sliced off below.
        pts_pad = jnp.pad(pts_pad, ((0, 0), (0, n_pad - N)))

    joints = joints_obs.astype(jnp.float32)
    gbig = _build_gbig(gs_joint)

    kernel = functools.partial(_closest_joint_kernel, num_joints=J, chunk=chunk)

    out_t = pl.pallas_call(
        kernel,
        out_shape=jax.ShapeDtypeStruct((3, n_pad), jnp.float32),
        grid=(n_blocks,),
        in_specs=[
            pl.BlockSpec((3, tile_n), lambda i: (0, i)),   # points, lane-dense
            pl.BlockSpec((J, 3), lambda i: (0, 0)),        # joints (grid-invariant)
            pl.BlockSpec((16, J), lambda i: (0, 0)),       # fused gather matrix
        ],
        out_specs=pl.BlockSpec((3, tile_n), lambda i: (0, i)),
        compiler_params=pltpu.CompilerParams(
            dimension_semantics=("parallel",)),
    )(pts_pad, joints, gbig)

    return out_t[:, :N]


def skeletal_motion_closest_joint(pts, joints_obs, gs_joint, **kwargs):
    """(N, 3) convenience wrapper matching SkeletalMotion.forward_closest_joint.

    NOTE(perf): the transpose+pad / slice+transpose here are extra HBM passes
    outside the kernel; keep points (3, N) in the calling pipeline and use
    skeletal_motion_closest_joint_planar when possible.
    """
    out_t = skeletal_motion_closest_joint_planar(
        pts.astype(jnp.float32).T, joints_obs, gs_joint, **kwargs)
    return out_t.T


# ----------------------------------------------------------------------------
# Glue matching MotionBasisComputer.observation_to_standard_to_canonical
# ----------------------------------------------------------------------------
def obs_to_canonical(gs_obs, gs_cnl):
    """Gs_final = Gs_cnl @ inv(Gs_obs)  (tiny J x 4 x 4 work; plain JAX)."""
    return jnp.matmul(gs_cnl, jnp.linalg.inv(gs_obs))


def _random_rigid_transforms(key, num):
    """Deterministic synthetic stand-in for SMPL joint transforms."""
    k1, k2 = jax.random.split(key)
    a = jax.random.normal(k1, (num, 3, 3), dtype=jnp.float32)
    q, _ = jnp.linalg.qr(a)                              # orthonormal 3x3
    t = 0.2 * jax.random.normal(k2, (num, 3), dtype=jnp.float32)
    g = jnp.zeros((num, 4, 4), dtype=jnp.float32)
    g = g.at[:, :3, :3].set(q)
    g = g.at[:, :3, 3].set(t)
    g = g.at[:, 3, 3].set(1.0)
    return g


def _reference_closest_joint(pts, joints_obs, gs_joint):
    """Pure-JAX reference of forward_closest_joint (module semantics).

    Uses the (p - j)^2 distance form (argmin-equivalent to the module's
    xx + yy - 2*x@y.T with sqrt/clamp; avoids near-tie flakes in the check).
    """
    d2 = jnp.sum((pts[:, None, :] - joints_obs[None, :, :]) ** 2, axis=-1)
    idx = jnp.argmin(d2, axis=1)
    r = gs_joint[idx, :3, :3]
    t = gs_joint[idx, :3, 3]
    return jnp.einsum("nij,nj->ni", r, pts) + t


# ----------------------------------------------------------------------------
if __name__ == "__main__":
    key = jax.random.PRNGKey(0)
    k_pts, k_j, k_obs, k_cnl = jax.random.split(key, 4)

    J = 24                      # SMPL NUM_JOINTS + 1
    joints_obs = jax.random.normal(k_j, (J, 3), dtype=jnp.float32)

    # Synthetic deterministic observation / canonical joint transforms.
    gs_obs_joint = _random_rigid_transforms(k_obs, J)     # (J, 4, 4)
    gs_cnl_joint = _random_rigid_transforms(k_cnl, J)     # (J, 4, 4)
    gs_joint = obs_to_canonical(gs_obs_joint, gs_cnl_joint)

    # N=1000 -> grid=(2,) of 512-lane tiles (megacore-friendly split);
    # N=5000 -> grid=(2,) of 2560-lane tiles, 5 unrolled 512-lane chunks each.
    for n in (1000, 5000):
        k_pts, sub = jax.random.split(k_pts)
        pts = jax.random.normal(sub, (n, 3), dtype=jnp.float32)

        pts_new = jax.block_until_ready(
            skeletal_motion_closest_joint(pts, joints_obs, gs_joint))

        ref = _reference_closest_joint(pts, joints_obs, gs_joint)
        assert pts_new.shape == (n, 3) and pts_new.dtype == jnp.float32
        assert jnp.allclose(pts_new, ref, atol=1e-4, rtol=1e-4), (
            n, float(jnp.max(jnp.abs(pts_new - ref))))

    print("KERNEL_OK")
</pallas_src>

<mosaic_0001>
module attributes {stable_mosaic.version = 11 : i64} {
  func.func @_closest_joint_kernel(%arg0: i32, %arg1: memref<3x512xf32, #tpu.memory_space<vmem>>, %arg2: memref<24x3xf32, #tpu.memory_space<vmem>>, %arg3: memref<16x24xf32, #tpu.memory_space<vmem>>, %arg4: memref<3x512xf32, #tpu.memory_space<vmem>>) attributes {dimension_semantics = [#tpu.dimension_semantics<parallel>], iteration_bounds = array<i64: 2>, scalar_prefetch = 0 : i64, scratch_operands = 0 : i64, tpu.core_type = #tpu.core_type<tc>, window_params = [{transform_indices = @transform_0, window_bounds = array<i64: 3, 512>}, {pipeline_mode = #tpu.pipeline_mode<synchronous>, transform_indices = @transform_1, window_bounds = array<i64: 24, 3>}, {pipeline_mode = #tpu.pipeline_mode<synchronous>, transform_indices = @transform_2, window_bounds = array<i64: 16, 24>}, {transform_indices = @transform_3, window_bounds = array<i64: 3, 512>}]} {
    %c0 = arith.constant 0 : index
    %c0_0 = arith.constant 0 : index
    %0 = vector.load %arg2[%c0, %c0_0] : memref<24x3xf32, #tpu.memory_space<vmem>>, vector<24x3xf32>
    %1 = vector.extract_strided_slice %0 {offsets = [0, 0], sizes = [24, 1], strides = [1, 1]} : vector<24x3xf32> to vector<24x1xf32>
    %2 = vector.extract_strided_slice %0 {offsets = [0, 1], sizes = [24, 1], strides = [1, 1]} : vector<24x3xf32> to vector<24x1xf32>
    %3 = vector.extract_strided_slice %0 {offsets = [0, 2], sizes = [24, 1], strides = [1, 1]} : vector<24x3xf32> to vector<24x1xf32>
    %c0_1 = arith.constant 0 : index
    %c0_2 = arith.constant 0 : index
    %4 = vector.load %arg3[%c0_1, %c0_2] : memref<16x24xf32, #tpu.memory_space<vmem>>, vector<16x24xf32>
    %5 = tpu.iota {dimensions = array<i32: 0>} : vector<24x1xi32>
    %c0_i32 = arith.constant 0 : i32
    %c512_i32 = arith.constant 512 : i32
    %6 = arith.muli %c0_i32, %c512_i32 : i32
    %7 = tpu.assume_multiple %6, 512 : i32
    %c0_3 = arith.constant 0 : index
    %8 = arith.index_cast %7 : i32 to index
    %9 = vector.load %arg1[%c0_3, %8] : memref<3x512xf32, #tpu.memory_space<vmem>>, vector<3x512xf32>
    %10 = vector.extract_strided_slice %9 {offsets = [0, 0], sizes = [1, 512], strides = [1, 1]} : vector<3x512xf32> to vector<1x512xf32>
    %11 = vector.extract_strided_slice %9 {offsets = [1, 0], sizes = [1, 512], strides = [1, 1]} : vector<3x512xf32> to vector<1x512xf32>
    %12 = vector.extract_strided_slice %9 {offsets = [2, 0], sizes = [1, 512], strides = [1, 1]} : vector<3x512xf32> to vector<1x512xf32>
    %13 = vector.broadcast %10 : vector<1x512xf32> to vector<24x512xf32>
    %14 = vector.broadcast %1 : vector<24x1xf32> to vector<24x512xf32>
    %15 = arith.subf %13, %14 : vector<24x512xf32>
    %16 = vector.broadcast %11 : vector<1x512xf32> to vector<24x512xf32>
    %17 = vector.broadcast %2 : vector<24x1xf32> to vector<24x512xf32>
    %18 = arith.subf %16, %17 : vector<24x512xf32>
    %19 = vector.broadcast %12 : vector<1x512xf32> to vector<24x512xf32>
    %20 = vector.broadcast %3 : vector<24x1xf32> to vector<24x512xf32>
    %21 = arith.subf %19, %20 : vector<24x512xf32>
    %22 = arith.mulf %15, %15 : vector<24x512xf32>
    %23 = arith.mulf %18, %18 : vector<24x512xf32>
    %24 = arith.addf %22, %23 : vector<24x512xf32>
    %25 = arith.mulf %21, %21 : vector<24x512xf32>
    %26 = arith.addf %24, %25 : vector<24x512xf32>
    %cst = arith.constant dense<0x7F800000> : vector<512xf32>
    %27 = vector.multi_reduction <minimumf>, %26, %cst [0] : vector<24x512xf32> to vector<512xf32>
    %28 = vector.shape_cast %27 : vector<512xf32> to vector<1x512xf32>
    %29 = vector.broadcast %28 : vector<1x512xf32> to vector<24x512xf32>
    %30 = arith.cmpf ole, %26, %29 : vector<24x512xf32>
    %c24_i32 = arith.constant 24 : i32
    %31 = vector.shape_cast %5 : vector<24x1xi32> to vector<24x1xi32>
    %32 = vector.broadcast %31 : vector<24x1xi32> to vector<24x512xi32>
    %33 = vector.broadcast %c24_i32 : i32 to vector<24x512xi32>
    %34 = arith.select %30, %32, %33 : vector<24x512xi1>, vector<24x512xi32>
    %cst_4 = arith.constant dense<2147483647> : vector<512xi32>
    %35 = vector.multi_reduction <minsi>, %34, %cst_4 [0] : vector<24x512xi32> to vector<512xi32>
    %36 = vector.shape_cast %35 : vector<512xi32> to vector<1x512xi32>
    %37 = vector.broadcast %5 : vector<24x1xi32> to vector<24x512xi32>
    %38 = vector.broadcast %36 : vector<1x512xi32> to vector<24x512xi32>
    %39 = arith.cmpi eq, %37, %38 : vector<24x512xi32>
    %40 = arith.extui %39 : vector<24x512xi1> to vector<24x512xi32>
    %41 = arith.sitofp %40 : vector<24x512xi32> to vector<24x512xf32>
    %cst_5 = arith.constant dense<0.000000e+00> : vector<16x512xf32>
    %42 = tpu.matmul %4, %41, %cst_5 {dimension_numbers = #tpu.dot_dimension_numbers<[1], [0], [0], [1], [0, 0, 1, 1], [], []>} : vector<16x24xf32>, vector<24x512xf32>, vector<16x512xf32> -> vector<16x512xf32>
    %43 = vector.extract_strided_slice %42 {offsets = [0, 0], sizes = [3, 512], strides = [1, 1]} : vector<16x512xf32> to vector<3x512xf32>
    %44 = vector.broadcast %10 : vector<1x512xf32> to vector<3x512xf32>
    %45 = arith.mulf %43, %44 : vector<3x512xf32>
    %46 = vector.extract_strided_slice %42 {offsets = [3, 0], sizes = [3, 512], strides = [1, 1]} : vector<16x512xf32> to vector<3x512xf32>
    %47 = vector.broadcast %11 : vector<1x512xf32> to vector<3x512xf32>
    %48 = arith.mulf %46, %47 : vector<3x512xf32>
    %49 = arith.addf %45, %48 : vector<3x512xf32>
    %50 = vector.extract_strided_slice %42 {offsets = [8, 0], sizes = [3, 512], strides = [1, 1]} : vector<16x512xf32> to vector<3x512xf32>
    %51 = vector.broadcast %12 : vector<1x512xf32> to vector<3x512xf32>
    %52 = arith.mulf %50, %51 : vector<3x512xf32>
    %53 = arith.addf %49, %52 : vector<3x512xf32>
    %54 = vector.extract_strided_slice %42 {offsets = [11, 0], sizes = [3, 512], strides = [1, 1]} : vector<16x512xf32> to vector<3x512xf32>
    %55 = arith.addf %53, %54 : vector<3x512xf32>
    %c0_6 = arith.constant 0 : index
    %56 = arith.index_cast %7 : i32 to index
    %57 = vector.load %arg4[%c0_6, %56] : memref<3x512xf32, #tpu.memory_space<vmem>>, vector<3x512xf32>
    tpu.vector_store %arg4[%c0_6, %56], %55 {strides = array<i32>} : memref<3x512xf32, #tpu.memory_space<vmem>>, vector<3x512xf32>,
    %c1_i32 = arith.constant 1 : i32
    return
  }
  func.func @transform_0(%arg0: i32) -> (i32, i32) {
    %c0_i32 = arith.constant 0 : i32
    %c0_i32_0 = arith.constant 0 : i32
    return %c0_i32, %arg0 : i32, i32
  }
  func.func @transform_1(%arg0: i32) -> (i32, i32) {
    %c0_i32 = arith.constant 0 : i32
    %c0_i32_0 = arith.constant 0 : i32
    %c0_i32_1 = arith.constant 0 : i32
    return %c0_i32, %c0_i32_0 : i32, i32
  }
  func.func @transform_2(%arg0: i32) -> (i32, i32) {
    %c0_i32 = arith.constant 0 : i32
    %c0_i32_0 = arith.constant 0 : i32
    %c0_i32_1 = arith.constant 0 : i32
    return %c0_i32, %c0_i32_0 : i32, i32
  }
  func.func @transform_3(%arg0: i32) -> (i32, i32) {
    %c0_i32 = arith.constant 0 : i32
    %c0_i32_0 = arith.constant 0 : i32
    return %c0_i32, %arg0 : i32, i32
  }
}

</mosaic_0001>

<llo_original>
// kernel: tpu_custom_call.1
$region0: #{tpu_custom_call.1}
  #allocation0 [shape = 'u32[]', space=smem, size = 0x4, offset = 0x4, fixed_abs, tag = 'smem constant byte address 0x4 - core index']
  #allocation1 [shape = 'u32[144,128]{1,0:T(1,128)}', space=vmem, size = 0x12000, scoped, tag = 'internal scratch']
  %s0 = inlined_call_operand.hbm [shape: f32[3,1024], index: 0, kind: input, shape index: {}]
  %s1 = inlined_call_operand.vmem [shape: f32[24,3], index: 1, kind: input, shape index: {}]
  %s2 = inlined_call_operand.vmem [shape: f32[16,24], index: 2, kind: input, shape index: {}]
  %s3 = inlined_call_operand.hbm [shape: f32[3,1024], index: 3, kind: output, shape index: {}]
  %s4 = sld [smem:[#allocation0]]
  $region49: #{tpu_custom_call.1} parent=0
    _
  %s6 = ssub.s32 1, %s4
  %s7 = scalar_select 0, %s6, %s4
  $region1: #{tpu_custom_call.1} parent=0
    #allocation2 [shape = 'u8[16384]{0}', space=vmem, size = 0x4000, scoped, tag = 'input window, operand 0']
    #allocation3 [shape = 's32[2]{0}', space=sflag, size = 0x8, scoped, tag = 'scoped memory for tpu_custom_call.1']
    #allocation4 [shape = 's32[2]{0}', space=sflag, size = 0x8, scoped, tag = 'scoped memory for tpu_custom_call.1']
    #allocation5 [shape = 'u8[16384]{0}', space=vmem, size = 0x4000, scoped, tag = 'output window, operand 0']
    %8 = vsyncpa [#allocation3], 0
    %s9 = scalar_lea.sflag [#allocation3], 1
    %10 = vsyncpa %s9, 0
    %11 = vsyncpa [#allocation4], 0
    %s12 = scalar_lea.sflag [#allocation4], 1
    %13 = vsyncpa %s12, 0
    loop: start=0, step=1, limit=4
    $region2: #{tpu_custom_call.1} parent=1 // loop_pre_header
      _
    $region3: #{tpu_custom_call.1} parent=1 // loop_header
      %s15 = sphi 0, %s19
      %p16 = scmp.ge.s32.totalorder %s15, 4
      %s25 = sphi 0, %s27
      %s28 = sphi 0, %s25
      %s29 = sphi 0, %s28
      %s45 = sphi 0, %s29
      %s49 = sphi 0, %s49
      %s51 = sphi 0, %s49
      %s52 = sphi 0, %s51
      %s66 = sphi 0, %s52
      %s70 = sphi 0, %s70
      %s72 = sphi 0, %s70
      %s73 = sphi 0, %s72
      %s87 = sphi 0, %s73
      %s93 = sphi 0, %s95
      %s96 = sphi 0, %s93
      %s97 = sphi 0, %s96
      %s113 = sphi 0, %s97
    $region4: #{tpu_custom_call.1} parent=1 // loop_header_branch
      %18 = sbr.rel (%p16) target = $region8
    $region5: #{tpu_custom_call.1} parent=1 // loop_body
      %s20 = ssub.s32 %s15, 1
      %s21 = ssub.s32 %s15, 2
      %s22 = sadd.s32 %s15, 1
      %s23 = ssub.s32 %s15, %s22
      %p24 = scmp.eq.s32.totalorder %s23, 0
      %s26 = sadd.s32 %s25, 1
      %s27 = scalar_select %p24, %s25, %s26
      %p30 = pneg %p24
      %p31 = scmp.eq.s32.totalorder %s15, 1
      %p32 = por %p30, %p31
      %p33 = scmp.ne.s32.totalorder %s25, %s28
      %p34 = scmp.eq.s32.totalorder %s15, 0
      %p35 = por %p33, %p34
      %p36 = scmp.ne.s32.totalorder %s25, %s28
      %p37 = scmp.eq.s32.totalorder %s20, 1
      %p38 = por %p36, %p37
      %p39 = scmp.ne.s32.totalorder %s28, %s29
      %p40 = scmp.eq.s32.totalorder %s20, 0
      %p41 = por %p39, %p40
      %p42 = scmp.ne.s32.totalorder %s28, %s29
      %p43 = scmp.eq.s32.totalorder %s21, 1
      %p44 = por %p42, %p43
      %p46 = scmp.ne.s32.totalorder %s29, %s45
      %p47 = scmp.eq.s32.totalorder %s21, 0
      %p48 = por %p46, %p47
      %s50 = sadd.s32 %s49, 1
      %p53 = scmp.eq.s32.totalorder %s15, 1
      %p54 = scmp.ne.s32.totalorder %s49, %s51
      %p55 = scmp.eq.s32.totalorder %s15, 0
      %p56 = por %p54, %p55
      %p57 = scmp.ne.s32.totalorder %s49, %s51
      %p58 = scmp.eq.s32.totalorder %s20, 1
      %p59 = por %p57, %p58
      %p60 = scmp.ne.s32.totalorder %s51, %s52
      %p61 = scmp.eq.s32.totalorder %s20, 0
      %p62 = por %p60, %p61
      %p63 = scmp.ne.s32.totalorder %s51, %s52
      %p64 = scmp.eq.s32.totalorder %s21, 1
      %p65 = por %p63, %p64
      %p67 = scmp.ne.s32.totalorder %s52, %s66
      %p68 = scmp.eq.s32.totalorder %s21, 0
      %p69 = por %p67, %p68
      %s71 = sadd.s32 %s70, 1
      %p74 = scmp.eq.s32.totalorder %s15, 1
      %p75 = scmp.ne.s32.totalorder %s70, %s72
      %p76 = scmp.eq.s32.totalorder %s15, 0
      %p77 = por %p75, %p76
      %p78 = scmp.ne.s32.totalorder %s70, %s72
      %p79 = scmp.eq.s32.totalorder %s20, 1
      %p80 = por %p78, %p79
      %p81 = scmp.ne.s32.totalorder %s72, %s73
      %p82 = scmp.eq.s32.totalorder %s20, 0
      %p83 = por %p81, %p82
      %p84 = scmp.ne.s32.totalorder %s72, %s73
      %p85 = scmp.eq.s32.totalorder %s21, 1
      %p86 = por %p84, %p85
      %p88 = scmp.ne.s32.totalorder %s73, %s87
      %p89 = scmp.eq.s32.totalorder %s21, 0
      %p90 = por %p88, %p89
      %s91 = ssub.s32 %s15, %s22
      %p92 = scmp.eq.s32.totalorder %s91, 0
      %s94 = sadd.s32 %s93, 1
      %s95 = scalar_select %p92, %s93, %s94
      %p98 = pneg %p92
      %p99 = scmp.eq.s32.totalorder %s15, 1
      %p100 = por %p98, %p99
      %p101 = scmp.ne.s32.totalorder %s93, %s96
      %p102 = scmp.eq.s32.totalorder %s15, 0
      %p103 = por %p101, %p102
      %p104 = scmp.ne.s32.totalorder %s93, %s96
      %p105 = scmp.eq.s32.totalorder %s20, 1
      %p106 = por %p104, %p105
      %p107 = scmp.ne.s32.totalorder %s96, %s97
      %p108 = scmp.eq.s32.totalorder %s20, 0
      %p109 = por %p107, %p108
      %p110 = scmp.ne.s32.totalorder %s96, %s97
      %p111 = scmp.eq.s32.totalorder %s21, 1
      %p112 = por %p110, %p111
      %p114 = scmp.ne.s32.totalorder %s97, %s113
      %p115 = scmp.eq.s32.totalorder %s21, 0
      %p116 = por %p114, %p115
      %p117 = scmp.le.s32.totalorder 1, %s15
      %p118 = scmp.lt.s32.totalorder %s15, 3
      %p119 = pnand %p117, %p118
      %p120 = pneg %p119
      // Predicated region
      $region9: #{tpu_custom_call.1} parent=5 // pred_check
        _
      $region10: #{tpu_custom_call.1} parent=5 // pred_check_branch
        %122 = sbr.rel (%p119) target = $region12
      $region11: #{tpu_custom_call.1} parent=5 // pred_region
        %s123 = ssub.s32 %s15, 1
        // Predicated region
        $region13: #{tpu_custom_call.1} parent=11 // pred_check
          %p124 = pneg %p62
        $region14: #{tpu_custom_call.1} parent=11 // pred_check_branch
          %126 = sbr.rel (%p124) target = $region16
        $region15: #{tpu_custom_call.1} parent=11 // pred_region
          _
        $region16: #{tpu_custom_call.1} parent=11 // pred_fallthru
          _
        // Predicated region
        $region17: #{tpu_custom_call.1} parent=11 // pred_check
          %p127 = pneg %p83
        $region18: #{tpu_custom_call.1} parent=11 // pred_check_branch
          %129 = sbr.rel (%p127) target = $region20
        $region19: #{tpu_custom_call.1} parent=11 // pred_region
          _
        $region20: #{tpu_custom_call.1} parent=11 // pred_fallthru
          _
      $region12: #{tpu_custom_call.1} parent=5 // pred_fallthru
        _
      %p130 = scmp.lt.s32.totalorder %s15, 2
      // Predicated region
      $region21: #{tpu_custom_call.1} parent=5 // pred_check
        %p131 = pneg %p130
      $region22: #{tpu_custom_call.1} parent=5 // pred_check_branch
        %133 = sbr.rel (%p131) target = $region24
      $region23: #{tpu_custom_call.1} parent=5 // pred_region
        // Predicated region
        $region25: #{tpu_custom_call.1} parent=23 // pred_check
          %p134 = pneg %p35
        $region26: #{tpu_custom_call.1} parent=23 // pred_check_branch
          %136 = sbr.rel (%p134) target = $region28
        $region27: #{tpu_custom_call.1} parent=23 // pred_region
          %s137 = sand.u32 %s25, 1
          %s138 = scalar_lea.sflag [#allocation3], %s137
          %s139 = sand.u32 %s25, 1
          %s140 = smul.addr %s139, 16
          %s141 = scalar_lea.vmem [#allocation2], %s140
          %s142 = smul.u32 4, %s15
          %s144 = ssub.s32 256, 256
          %145 = vsyncadd %s138, %s144
          %s146 = smul.addr %s142, 64
          %s147 = scalar_lea.hbm %s0, %s146
          %s149 = sshll.u32 %s141, 4
          %s150 = int_to_ptr.vmem [resolvable:$true] %s149
          %152 = dma.hbm_to_vmem [thread:$0]  %s147, 256, %s150, %s138
        $region28: #{tpu_custom_call.1} parent=23 // pred_fallthru
          _
      $region24: #{tpu_custom_call.1} parent=5 // pred_fallthru
        _
      %p153 = scmp.le.s32.totalorder 1, %s15
      %p154 = scmp.lt.s32.totalorder %s15, 3
      %p155 = pnand %p153, %p154
      %p156 = pneg %p155
      // Predicated region
      $region29: #{tpu_custom_call.1} parent=5 // pred_check
        _
      $region30: #{tpu_custom_call.1} parent=5 // pred_check_branch
        %158 = sbr.rel (%p155) target = $region32
      $region31: #{tpu_custom_call.1} parent=5 // pred_region
        %s159 = ssub.s32 %s15, 1
        %s160 = sand.u32 %s28, 1
        %s161 = scalar_lea.sflag [#allocation3], %s160
        %s162 = sand.u32 %s28, 1
        %s163 = smul.addr %s162, 16
        %s164 = scalar_lea.vmem [#allocation2], %s163
        // Predicated region
        $region33: #{tpu_custom_call.1} parent=31 // pred_check
          %p165 = pneg %p41
        $region34: #{tpu_custom_call.1} parent=31 // pred_check_branch
          %167 = sbr.rel (%p165) target = $region36
        $region35: #{tpu_custom_call.1} parent=31 // pred_region
          %168 = dma.done %s161, 256
        $region36: #{tpu_custom_call.1} parent=31 // pred_fallthru
          _
        %s169 = sand.u32 %s28, 1
        %s170 = scalar_lea.sflag [#allocation3], %s169
        %s171 = sand.u32 %s28, 1
        %s172 = smul.addr %s171, 16
        %s173 = scalar_lea.vmem [#allocation2], %s172
        %p174 = pneg %p41
        %p175 = pneg %p38
        %p176 = pneg %p62
        %p177 = pneg %p59
        %p178 = pneg %p83
        %p179 = pneg %p80
        %p180 = pneg %p109
        %p181 = pneg %p106
        %s182 = sand.u32 %s96, 1
        %s183 = scalar_lea.sflag [#allocation4], %s182
        %s184 = sand.u32 %s96, 1
        %s185 = smul.addr %s184, 16
        %s186 = scalar_lea.vmem [#allocation5], %s185
        %s187 = smul.u32 4, %s20
        %s188 = smul.u32 4, %s20
        %v189 = vld [vmem:[%s1] sm:$0xff]
        %v190 = vld [vmem:[%s1 + $0x8] sm:$0xff]
        %v191 = vld [vmem:[%s1 + $0x10] sm:$0xff]
        %v192 = vld [vmem:[%s2] sm:$0xff]
        %v193 = vld [vmem:[%s2 + $0x8] sm:$0xff]
        %v194 = vlaneseq
        %v195 = vshrl.u32 %v194, 7
        %v196 = vadd.s32 %v195, 8
        %v197 = vadd.s32 %v195, 16
        %v198 = vld [vmem:[%s164] sm:$0x77]
        %v199 = vld [vmem:[%s164 + $0x8] sm:$0x77]
        %v202 = vlaneseq
        %v203 = vshrl.u32 %v202, 7
        %v204 = vsub.s32 0, %v203
        %v205 = vrot.slane %v198, %v204
        %v206 = vlaneseq
        %v207 = vshrl.u32 %v206, 7
        %v208 = vsub.s32 4, %v207
        %v209 = vrot.slane %v198, %v208
        %v210 = vlaneseq
        %v211 = vshrl.u32 %v210, 7
        %v212 = vsub.s32 0, %v211
        %v213 = vrot.slane %v199, %v212
        %v214 = vlaneseq
        %v215 = vshrl.u32 %v214, 7
        %v216 = vsub.s32 4, %v215
        %v217 = vrot.slane %v199, %v216
        %v222 = vlaneseq
        %v223 = vshrl.u32 %v222, 7
        %v224 = vsub.s32 0, %v223
        %v225 = vrot.slane %v205, %v224
        %v226 = vlaneseq
        %v227 = vshrl.u32 %v226, 7
        %v228 = vsub.s32 0, %v227
        %v229 = vrot.slane %v209, %v228
        %v230 = vlaneseq
        %v231 = vshrl.u32 %v230, 7
        %v232 = vsub.s32 0, %v231
        %v233 = vrot.slane %v213, %v232
        %v234 = vlaneseq
        %v235 = vshrl.u32 %v234, 7
        %v236 = vsub.s32 0, %v235
        %v237 = vrot.slane %v217, %v236
        %239 = vset.pattern.permute.xlu0 0
        %240 = vperm.xlu0 %239, %v189
        %v241 = vpop.permute.xlu0 %240
        %244 = vset.pattern.permute.xlu0 0
        %245 = vperm.xlu0 %244, %v190
        %v246 = vpop.permute.xlu0 %245
        %249 = vset.pattern.permute.xlu0 0
        %250 = vperm.xlu0 %249, %v191
        %v251 = vpop.permute.xlu0 %250
        %v253 = vsub.f32 %v225, %v241
        %v254 = vsub.f32 %v229, %v241
        %v255 = vsub.f32 %v233, %v241
        %v256 = vsub.f32 %v237, %v241
        %v257 = vsub.f32 %v225, %v246
        %v258 = vsub.f32 %v229, %v246
        %v259 = vsub.f32 %v233, %v246
        %v260 = vsub.f32 %v237, %v246
        %v261 = vsub.f32 %v225, %v251
        %v262 = vsub.f32 %v229, %v251
        %v263 = vsub.f32 %v233, %v251
        %v264 = vsub.f32 %v237, %v251
        %v265 = vlaneseq
        %v266 = vshrl.u32 %v265, 7
        %v267 = vsub.s32 1, %v266
        %v268 = vrot.slane %v198, %v267
        %v269 = vlaneseq
        %v270 = vshrl.u32 %v269, 7
        %v271 = vsub.s32 5, %v270
        %v272 = vrot.slane %v198, %v271
        %v273 = vlaneseq
        %v274 = vshrl.u32 %v273, 7
        %v275 = vsub.s32 1, %v274
        %v276 = vrot.slane %v199, %v275
        %v277 = vlaneseq
        %v278 = vshrl.u32 %v277, 7
        %v279 = vsub.s32 5, %v278
        %v280 = vrot.slane %v199, %v279
        %v285 = vlaneseq
        %v286 = vshrl.u32 %v285, 7
        %v287 = vsub.s32 1, %v286
        %v288 = vrot.slane %v268, %v287
        %v289 = vlaneseq
        %v290 = vshrl.u32 %v289, 7
        %v291 = vsub.s32 1, %v290
        %v292 = vrot.slane %v272, %v291
        %v293 = vlaneseq
        %v294 = vshrl.u32 %v293, 7
        %v295 = vsub.s32 1, %v294
        %v296 = vrot.slane %v276, %v295
        %v297 = vlaneseq
        %v298 = vshrl.u32 %v297, 7
        %v299 = vsub.s32 1, %v298
        %v300 = vrot.slane %v280, %v299
        %301 = vset.pattern.permute.xlu0 1
        %302 = vperm.xlu0 %301, %v189
        %v303 = vpop.permute.xlu0 %302
        %305 = vset.pattern.permute.xlu0 1
        %306 = vperm.xlu0 %305, %v190
        %v307 = vpop.permute.xlu0 %306
        %309 = vset.pattern.permute.xlu0 1
        %310 = vperm.xlu0 %309, %v191
        %v311 = vpop.permute.xlu0 %310
        %v313 = vsub.f32 %v288, %v303
        %v314 = vsub.f32 %v292, %v303
        %v315 = vsub.f32 %v296, %v303
        %v316 = vsub.f32 %v300, %v303
        %v317 = vsub.f32 %v288, %v307
        %v318 = vsub.f32 %v292, %v307
        %v319 = vsub.f32 %v296, %v307
        %v320 = vsub.f32 %v300, %v307
        %v321 = vsub.f32 %v288, %v311
        %v322 = vsub.f32 %v292, %v311
        %v323 = vsub.f32 %v296, %v311
        %v324 = vsub.f32 %v300, %v311
        %v325 = vlaneseq
        %v326 = vshrl.u32 %v325, 7
        %v327 = vsub.s32 2, %v326
        %v328 = vrot.slane %v198, %v327
        %v329 = vlaneseq
        %v330 = vshrl.u32 %v329, 7
        %v331 = vsub.s32 6, %v330
        %v332 = vrot.slane %v198, %v331
        %v333 = vlaneseq
        %v334 = vshrl.u32 %v333, 7
        %v335 = vsub.s32 2, %v334
        %v336 = vrot.slane %v199, %v335
        %v337 = vlaneseq
        %v338 = vshrl.u32 %v337, 7
        %v339 = vsub.s32 6, %v338
        %v340 = vrot.slane %v199, %v339
        %v345 = vlaneseq
        %v346 = vshrl.u32 %v345, 7
        %v347 = vsub.s32 2, %v346
        %v348 = vrot.slane %v328, %v347
        %v349 = vlaneseq
        %v350 = vshrl.u32 %v349, 7
        %v351 = vsub.s32 2, %v350
        %v352 = vrot.slane %v332, %v351
        %v353 = vlaneseq
        %v354 = vshrl.u32 %v353, 7
        %v355 = vsub.s32 2, %v354
        %v356 = vrot.slane %v336, %v355
        %v357 = vlaneseq
        %v358 = vshrl.u32 %v357, 7
        %v359 = vsub.s32 2, %v358
        %v360 = vrot.slane %v340, %v359
        %361 = vset.pattern.permute.xlu0 2
        %362 = vperm.xlu0 %361, %v189
        %v363 = vpop.permute.xlu0 %362
        %365 = vset.pattern.permute.xlu0 2
        %366 = vperm.xlu0 %365, %v190
        %v367 = vpop.permute.xlu0 %366
        %369 = vset.pattern.permute.xlu0 2
        %370 = vperm.xlu0 %369, %v191
        %v371 = vpop.permute.xlu0 %370
        %v373 = vsub.f32 %v348, %v363
        %v374 = vsub.f32 %v352, %v363
        %v375 = vsub.f32 %v356, %v363
        %v376 = vsub.f32 %v360, %v363
        %v377 = vsub.f32 %v348, %v367
        %v378 = vsub.f32 %v352, %v367
        %v379 = vsub.f32 %v356, %v367
        %v380 = vsub.f32 %v360, %v367
        %v381 = vsub.f32 %v348, %v371
        %v382 = vsub.f32 %v352, %v371
        %v383 = vsub.f32 %v356, %v371
        %v384 = vsub.f32 %v360, %v371
        %v385 = vmul.f32 %v253, %v253
        %v386 = vmul.f32 %v254, %v254
        %v387 = vmul.f32 %v255, %v255
        %v388 = vmul.f32 %v256, %v256
        %v389 = vmul.f32 %v257, %v257
        %v390 = vmul.f32 %v258, %v258
        %v391 = vmul.f32 %v259, %v259
        %v392 = vmul.f32 %v260, %v260
        %v393 = vmul.f32 %v261, %v261
        %v394 = vmul.f32 %v262, %v262
        %v395 = vmul.f32 %v263, %v263
        %v396 = vmul.f32 %v264, %v264
        %v397 = vmul.f32 %v313, %v313
        %v398 = vmul.f32 %v314, %v314
        %v399 = vmul.f32 %v315, %v315
        %v400 = vmul.f32 %v316, %v316
        %v401 = vmul.f32 %v317, %v317
        %v402 = vmul.f32 %v318, %v318
        %v403 = vmul.f32 %v319, %v319
        %v404 = vmul.f32 %v320, %v320
        %v405 = vmul.f32 %v321, %v321
        %v406 = vmul.f32 %v322, %v322
        %v407 = vmul.f32 %v323, %v323
        %v408 = vmul.f32 %v324, %v324
        %v409 = vadd.f32 %v385, %v397
        %v410 = vadd.f32 %v386, %v398
        %v411 = vadd.f32 %v387, %v399
        %v412 = vadd.f32 %v388, %v400
        %v413 = vadd.f32 %v389, %v401
        %v414 = vadd.f32 %v390, %v402
        %v415 = vadd.f32 %v391, %v403
        %v416 = vadd.f32 %v392, %v404
        %v417 = vadd.f32 %v393, %v405
        %v418 = vadd.f32 %v394, %v406
        %v419 = vadd.f32 %v395, %v407
        %v420 = vadd.f32 %v396, %v408
        %v421 = vmul.f32 %v373, %v373
        %v422 = vmul.f32 %v374, %v374
        %v423 = vmul.f32 %v375, %v375
        %v424 = vmul.f32 %v376, %v376
        %v425 = vmul.f32 %v377, %v377
        %v426 = vmul.f32 %v378, %v378
        %v427 = vmul.f32 %v379, %v379
        %v428 = vmul.f32 %v380, %v380
        %v429 = vmul.f32 %v381, %v381
        %v430 = vmul.f32 %v382, %v382
        %v431 = vmul.f32 %v383, %v383
        %v432 = vmul.f32 %v384, %v384
        %v433 = vadd.f32 %v409, %v421
        %v434 = vadd.f32 %v410, %v422
        %v435 = vadd.f32 %v411, %v423
        %v436 = vadd.f32 %v412, %v424
        %v437 = vadd.f32 %v413, %v425
        %v438 = vadd.f32 %v414, %v426
        %v439 = vadd.f32 %v415, %v427
        %v440 = vadd.f32 %v416, %v428
        %v441 = vadd.f32 %v417, %v429
        %v442 = vadd.f32 %v418, %v430
        %v443 = vadd.f32 %v419, %v431
        %v444 = vadd.f32 %v420, %v432
        %v445 = vmin.f32 %v433, %v437
        %v446 = vmin.f32 %v445, %v441
        %v447 = vrot.slane %v446, 4
        %v448 = vmin.f32 %v446, %v447
        %v449 = vrot.slane %v448, 2
        %v450 = vmin.f32 %v448, %v449
        %v451 = vrot.slane %v450, 1
        %v452 = vmin.f32 %v450, %v451
        %v453 = vmin.f32 %v434, %v438
        %v454 = vmin.f32 %v453, %v442
        %v455 = vrot.slane %v454, 4
        %v456 = vmin.f32 %v454, %v455
        %v457 = vrot.slane %v456, 2
        %v458 = vmin.f32 %v456, %v457
        %v459 = vrot.slane %v458, 1
        %v460 = vmin.f32 %v458, %v459
        %v461 = vmin.f32 %v435, %v439
        %v462 = vmin.f32 %v461, %v443
        %v463 = vrot.slane %v462, 4
        %v464 = vmin.f32 %v462, %v463
        %v465 = vrot.slane %v464, 2
        %v466 = vmin.f32 %v464, %v465
        %v467 = vrot.slane %v466, 1
        %v468 = vmin.f32 %v466, %v467
        %v469 = vmin.f32 %v436, %v440
        %v470 = vmin.f32 %v469, %v444
        %v471 = vrot.slane %v470, 4
        %v472 = vmin.f32 %v470, %v471
        %v473 = vrot.slane %v472, 2
        %v474 = vmin.f32 %v472, %v473
        %v475 = vrot.slane %v474, 1
        %v476 = vmin.f32 %v474, %v475
        %vm477 = vcmp.le.f32.partialorder %v433, %v452
        %vm478 = vcmp.le.f32.partialorder %v434, %v460
        %vm479 = vcmp.le.f32.partialorder %v435, %v468
        %vm480 = vcmp.le.f32.partialorder %v436, %v476
        %vm481 = vcmp.le.f32.partialorder %v437, %v452
        %vm482 = vcmp.le.f32.partialorder %v438, %v460
        %vm483 = vcmp.le.f32.partialorder %v439, %v468
        %vm484 = vcmp.le.f32.partialorder %v440, %v476
        %vm485 = vcmp.le.f32.partialorder %v441, %v452
        %vm486 = vcmp.le.f32.partialorder %v442, %v460
        %vm487 = vcmp.le.f32.partialorder %v443, %v468
        %vm488 = vcmp.le.f32.partialorder %v444, %v476
        %v489 = vsel %vm477, %v195, 24
        %v490 = vsel %vm478, %v195, 24
        %v491 = vsel %vm479, %v195, 24
        %v492 = vsel %vm480, %v195, 24
        %v493 = vsel %vm481, %v196, 24
        %v494 = vsel %vm482, %v196, 24
        %v495 = vsel %vm483, %v196, 24
        %v496 = vsel %vm484, %v196, 24
        %v497 = vsel %vm485, %v197, 24
        %v498 = vsel %vm486, %v197, 24
        %v499 = vsel %vm487, %v197, 24
        %v500 = vsel %vm488, %v197, 24
        %vm501 = vcmp.lt.s32.totalorder %v489, %v493
        %v502 = vsel %vm501, %v489, %v493
        %vm503 = vcmp.lt.s32.totalorder %v502, %v497
        %v504 = vsel %vm503, %v502, %v497
        %v505 = vrot.slane %v504, 4
        %vm506 = vcmp.lt.s32.totalorder %v504, %v505
        %v507 = vsel %vm506, %v504, %v505
        %v508 = vrot.slane %v507, 2
        %vm509 = vcmp.lt.s32.totalorder %v507, %v508
        %v510 = vsel %vm509, %v507, %v508
        %v511 = vrot.slane %v510, 1
        %vm512 = vcmp.lt.s32.totalorder %v510, %v511
        %v513 = vsel %vm512, %v510, %v511
        %vm514 = vcmp.lt.s32.totalorder %v490, %v494
        %v515 = vsel %vm514, %v490, %v494
        %vm516 = vcmp.lt.s32.totalorder %v515, %v498
        %v517 = vsel %vm516, %v515, %v498
        %v518 = vrot.slane %v517, 4
        %vm519 = vcmp.lt.s32.totalorder %v517, %v518
        %v520 = vsel %vm519, %v517, %v518
        %v521 = vrot.slane %v520, 2
        %vm522 = vcmp.lt.s32.totalorder %v520, %v521
        %v523 = vsel %vm522, %v520, %v521
        %v524 = vrot.slane %v523, 1
        %vm525 = vcmp.lt.s32.totalorder %v523, %v524
        %v526 = vsel %vm525, %v523, %v524
        %vm527 = vcmp.lt.s32.totalorder %v491, %v495
        %v528 = vsel %vm527, %v491, %v495
        %vm529 = vcmp.lt.s32.totalorder %v528, %v499
        %v530 = vsel %vm529, %v528, %v499
        %v531 = vrot.slane %v530, 4
        %vm532 = vcmp.lt.s32.totalorder %v530, %v531
        %v533 = vsel %vm532, %v530, %v531
        %v534 = vrot.slane %v533, 2
        %vm535 = vcmp.lt.s32.totalorder %v533, %v534
        %v536 = vsel %vm535, %v533, %v534
        %v537 = vrot.slane %v536, 1
        %vm538 = vcmp.lt.s32.totalorder %v536, %v537
        %v539 = vsel %vm538, %v536, %v537
        %vm540 = vcmp.lt.s32.totalorder %v492, %v496
        %v541 = vsel %vm540, %v492, %v496
        %vm542 = vcmp.lt.s32.totalorder %v541, %v500
        %v543 = vsel %vm542, %v541, %v500
        %v544 = vrot.slane %v543, 4
        %vm545 = vcmp.lt.s32.totalorder %v543, %v544
        %v546 = vsel %vm545, %v543, %v544
        %v547 = vrot.slane %v546, 2
        %vm548 = vcmp.lt.s32.totalorder %v546, %v547
        %v549 = vsel %vm548, %v546, %v547
        %v550 = vrot.slane %v549, 1
        %vm551 = vcmp.lt.s32.totalorder %v549, %v550
        %v552 = vsel %vm551, %v549, %v550
        %vm553 = vcmp.eq.s32.totalorder %v195, %v513
        %vm554 = vcmp.eq.s32.totalorder %v195, %v526
        %vm555 = vcmp.eq.s32.totalorder %v195, %v539
        %vm556 = vcmp.eq.s32.totalorder %v195, %v552
        %vm557 = vcmp.eq.s32.totalorder %v196, %v513
        %vm558 = vcmp.eq.s32.totalorder %v196, %v526
        %vm559 = vcmp.eq.s32.totalorder %v196, %v539
        %vm560 = vcmp.eq.s32.totalorder %v196, %v552
        %vm561 = vcmp.eq.s32.totalorder %v197, %v513
        %vm562 = vcmp.eq.s32.totalorder %v197, %v526
        %vm563 = vcmp.eq.s32.totalorder %v197, %v539
        %vm564 = vcmp.eq.s32.totalorder %v197, %v552
        %v565 = vsel %vm553, 1, 0
        %v566 = vsel %vm554, 1, 0
        %v567 = vsel %vm555, 1, 0
        %v568 = vsel %vm556, 1, 0
        %v569 = vsel %vm557, 1, 0
        %v570 = vsel %vm558, 1, 0
        %v571 = vsel %vm559, 1, 0
        %v572 = vsel %vm560, 1, 0
        %v573 = vsel %vm561, 1, 0
        %v574 = vsel %vm562, 1, 0
        %v575 = vsel %vm563, 1, 0
        %v576 = vsel %vm564, 1, 0
        %v577 = vcvt.s32.f32 %v565
        %v578 = vcvt.s32.f32 %v566
        %v579 = vcvt.s32.f32 %v567
        %v580 = vcvt.s32.f32 %v568
        %v581 = vcvt.s32.f32 %v569
        %v582 = vcvt.s32.f32 %v570
        %v583 = vcvt.s32.f32 %v571
        %v584 = vcvt.s32.f32 %v572
        %v585 = vcvt.s32.f32 %v573
        %v586 = vcvt.s32.f32 %v574
        %v587 = vcvt.s32.f32 %v575
        %v588 = vcvt.s32.f32 %v576
        %vm589 = vcmask 195584
        %v591 = vsel %vm589, %v192, 0
        %v594 = vsel %vm589, %v193, 0
        %596 = vmatprep.subr.mxu0 %v578
        %597 = vmatpush1.msra.mxu0 %v577
        %598 = vmatprep.subr.mxu0 %v582
        %599 = vmatpush1.msra.mxu0 %v581
        %600 = vmatprep.subr.mxu0 %v586
        %601 = vmatpush1.msra.mxu0 %v585
        %602 = vmatprep.subr.mxu0 0.0
        %603 = vmatpush1.msra.mxu0 0.0
        %604 = vmatprep.subr.mxu0 0.0
        %605 = vmatpush1.msra.mxu0 0.0
        %606 = vmatprep.subr.mxu0 0.0
        %607 = vmatpush1.msra.mxu0 0.0
        %608 = vmatprep.subr.mxu0 0.0
        %609 = vmatpush1.msra.mxu0 0.0
        %610 = vmatprep.subr.mxu0 0.0
        %611 = vmatpush1.msra.mxu0 0.0
        %612 = vmatprep.subr.mxu0 0.0
        %613 = vmatpush1.msra.mxu0 0.0
        %614 = vmatprep.subr.mxu0 0.0
        %615 = vmatpush1.msra.mxu0 0.0
        %616 = vmatprep.subr.mxu0 0.0
        %617 = vmatpush1.msra.mxu0 0.0
        %618 = vmatprep.subr.mxu0 0.0
        %619 = vmatpush1.msra.mxu0 0.0
        %620 = vmatprep.subr.mxu0 0.0
        %621 = vmatpush1.msra.mxu0 0.0
        %622 = vmatprep.subr.mxu0 0.0
        %623 = vmatpush1.msra.mxu0 0.0
        %624 = vmatprep.subr.mxu0 0.0
        %625 = vmatpush1.msra.mxu0 0.0
        %626 = vmatprep.subr.mxu0 0.0
        %627 = vmatpush1.msra.mxu0 0.0
        %628 = vmatprep.subr.mxu0 0.0
        %629 = vmatpush1.msra.mxu0 0.0
        %630 = vmatprep.subr.mxu0 0.0
        %631 = vmatpush1.msra.mxu0 0.0
        %632 = vmatprep.subr.mxu0 0.0
        %633 = vmatpush1.msra.mxu0 0.0
        %634 = vmatprep.subr.mxu0 0.0
        %635 = vmatpush1.msra.mxu0 0.0
        %636 = vmatprep.subr.mxu0 0.0
        %637 = vmatpush1.msra.mxu0 0.0
        %638 = vmatprep.subr.mxu0 0.0
        %639 = vmatpush1.msra.mxu0 0.0
        %640 = vmatprep.subr.mxu0 0.0
        %641 = vmatpush1.msra.mxu0 0.0
        %642 = vmatprep.subr.mxu0 0.0
        %643 = vmatpush1.msra.mxu0 0.0
        %644 = vmatprep.subr.mxu0 0.0
        %645 = vmatpush1.msra.mxu0 0.0
        %646 = vmatprep.subr.mxu0 0.0
        %647 = vmatpush1.msra.mxu0 0.0
        %648 = vmatprep.subr.mxu0 0.0
        %649 = vmatpush1.msra.mxu0 0.0
        %650 = vmatprep.subr.mxu0 0.0
        %651 = vmatpush1.msra.mxu0 0.0
        %652 = vmatprep.subr.mxu0 0.0
        %653 = vmatpush1.msra.mxu0 0.0
        %654 = vmatprep.subr.mxu0 0.0
        %655 = vmatpush1.msra.mxu0 0.0
        %656 = vmatprep.subr.mxu0 0.0
        %657 = vmatpush1.msra.mxu0 0.0
        %658 = vmatprep.subr.mxu0 0.0
        %659 = vmatpush1.msra.mxu0 0.0
        %660 = vmatprep.mubr.f32.mxu0 0.0
        %661 = vmatmul.mubr.f32.gmra.mrb[0].mxu0 %v591
        %v662 = vpop.f32.mrb[0].mxu0
        %v663 = vadd.f32 0.0, %v662
        %v664 = vpop.f32.mrb[0].mxu0
        %v665 = vadd.f32 0.0, %v664
        %666 = vmatprep.mubr.f32.mxu0 0.0
        %667 = vmatmul.mubr.f32.gmra.mrb[0].mxu0 %v594
        %v668 = vpop.f32.mrb[0].mxu0
        %v669 = vadd.f32 0.0, %v668
        %v670 = vpop.f32.mrb[0].mxu0
        %v671 = vadd.f32 0.0, %v670
        %672 = vdwg.mxu0
        %673 = vmatprep.subr.mxu0 %v580
        %674 = vmatpush1.msra.mxu0 %v579
        %675 = vmatprep.subr.mxu0 %v584
        %676 = vmatpush1.msra.mxu0 %v583
        %677 = vmatprep.subr.mxu0 %v588
        %678 = vmatpush1.msra.mxu0 %v587
        %679 = vmatprep.subr.mxu0 0.0
        %680 = vmatpush1.msra.mxu0 0.0
        %681 = vmatprep.subr.mxu0 0.0
        %682 = vmatpush1.msra.mxu0 0.0
        %683 = vmatprep.subr.mxu0 0.0
        %684 = vmatpush1.msra.mxu0 0.0
        %685 = vmatprep.subr.mxu0 0.0
        %686 = vmatpush1.msra.mxu0 0.0
        %687 = vmatprep.subr.mxu0 0.0
        %688 = vmatpush1.msra.mxu0 0.0
        %689 = vmatprep.subr.mxu0 0.0
        %690 = vmatpush1.msra.mxu0 0.0
        %691 = vmatprep.subr.mxu0 0.0
        %692 = vmatpush1.msra.mxu0 0.0
        %693 = vmatprep.subr.mxu0 0.0
        %694 = vmatpush1.msra.mxu0 0.0
        %695 = vmatprep.subr.mxu0 0.0
        %696 = vmatpush1.msra.mxu0 0.0
        %697 = vmatprep.subr.mxu0 0.0
        %698 = vmatpush1.msra.mxu0 0.0
        %699 = vmatprep.subr.mxu0 0.0
        %700 = vmatpush1.msra.mxu0 0.0
        %701 = vmatprep.subr.mxu0 0.0
        %702 = vmatpush1.msra.mxu0 0.0
        %703 = vmatprep.subr.mxu0 0.0
        %704 = vmatpush1.msra.mxu0 0.0
        %705 = vmatprep.subr.mxu0 0.0
        %706 = vmatpush1.msra.mxu0 0.0
        %707 = vmatprep.subr.mxu0 0.0
        %708 = vmatpush1.msra.mxu0 0.0
        %709 = vmatprep.subr.mxu0 0.0
        %710 = vmatpush1.msra.mxu0 0.0
        %711 = vmatprep.subr.mxu0 0.0
        %712 = vmatpush1.msra.mxu0 0.0
        %713 = vmatprep.subr.mxu0 0.0
        %714 = vmatpush1.msra.mxu0 0.0
        %715 = vmatprep.subr.mxu0 0.0
        %716 = vmatpush1.msra.mxu0 0.0
        %717 = vmatprep.subr.mxu0 0.0
        %718 = vmatpush1.msra.mxu0 0.0
        %719 = vmatprep.subr.mxu0 0.0
        %720 = vmatpush1.msra.mxu0 0.0
        %721 = vmatprep.subr.mxu0 0.0
        %722 = vmatpush1.msra.mxu0 0.0
        %723 = vmatprep.subr.mxu0 0.0
        %724 = vmatpush1.msra.mxu0 0.0
        %725 = vmatprep.subr.mxu0 0.0
        %726 = vmatpush1.msra.mxu0 0.0
        %727 = vmatprep.subr.mxu0 0.0
        %728 = vmatpush1.msra.mxu0 0.0
        %729 = vmatprep.subr.mxu0 0.0
        %730 = vmatpush1.msra.mxu0 0.0
        %731 = vmatprep.subr.mxu0 0.0
        %732 = vmatpush1.msra.mxu0 0.0
        %733 = vmatprep.subr.mxu0 0.0
        %734 = vmatpush1.msra.mxu0 0.0
        %735 = vmatprep.subr.mxu0 0.0
        %736 = vmatpush1.msra.mxu0 0.0
        %737 = vmatprep.mubr.f32.mxu0 0.0
        %738 = vmatmul.mubr.f32.gmra.mrb[0].mxu0 %v591
        %v739 = vpop.f32.mrb[0].mxu0
        %v740 = vadd.f32 0.0, %v739
        %v741 = vpop.f32.mrb[0].mxu0
        %v742 = vadd.f32 0.0, %v741
        %743 = vmatprep.mubr.f32.mxu0 0.0
        %744 = vmatmul.mubr.f32.gmra.mrb[0].mxu0 %v594
        %v745 = vpop.f32.mrb[0].mxu0
        %v746 = vadd.f32 0.0, %v745
        %v747 = vpop.f32.mrb[0].mxu0
        %v748 = vadd.f32 0.0, %v747
        %749 = vdwg.mxu0
        %v750 = vmul.f32 %v663, %v225
        %v751 = vmul.f32 %v665, %v229
        %v752 = vmul.f32 %v740, %v233
        %v753 = vmul.f32 %v742, %v237
        %v754 = vmul.f32 %v663, %v288
        %v755 = vmul.f32 %v665, %v292
        %v756 = vmul.f32 %v740, %v296
        %v757 = vmul.f32 %v742, %v300
        %v762 = vrot.slane %v754, 3
        %v763 = vrot.slane %v755, 3
        %v764 = vrot.slane %v756, 3
        %v765 = vrot.slane %v757, 3
        %v770 = vadd.f32 %v750, %v762
        %v771 = vadd.f32 %v751, %v763
        %v772 = vadd.f32 %v752, %v764
        %v773 = vadd.f32 %v753, %v765
        %v774 = vmul.f32 %v669, %v348
        %v775 = vmul.f32 %v671, %v352
        %v776 = vmul.f32 %v746, %v356
        %v777 = vmul.f32 %v748, %v360
        %v778 = vadd.f32 %v770, %v774
        %v779 = vadd.f32 %v771, %v775
        %v780 = vadd.f32 %v772, %v776
        %v781 = vadd.f32 %v773, %v777
        %v786 = vrot.slane %v669, 3
        %v787 = vrot.slane %v671, 3
        %v788 = vrot.slane %v746, 3
        %v789 = vrot.slane %v748, 3
        %v794 = vadd.f32 %v778, %v786
        %v795 = vadd.f32 %v779, %v787
        %v796 = vadd.f32 %v780, %v788
        %v797 = vadd.f32 %v781, %v789
        %v802 = vcombine.low %v794, %v795
        %v803 = vcombine.low %v796, %v797
        %806 = vst [vmem:[%s186] sm:$0x77] %v802
        %807 = vst [vmem:[%s186 + $0x8] sm:$0x77] %v803
        %s808 = sand.u32 %s96, 1
        %s809 = scalar_lea.sflag [#allocation4], %s808
        %s810 = sand.u32 %s96, 1
        %s811 = smul.addr %s810, 16
        %s812 = scalar_lea.vmem [#allocation5], %s811
        // Predicated region
        $region37: #{tpu_custom_call.1} parent=31 // pred_check
          %p813 = pneg %p106
        $region38: #{tpu_custom_call.1} parent=31 // pred_check_branch
          %815 = sbr.rel (%p813) target = $region40
        $region39: #{tpu_custom_call.1} parent=31 // pred_region
          %s816 = smul.u32 4, %s20
          %s818 = ssub.s32 256, 256
          %819 = vsyncadd %s809, %s818
          %s820 = smul.addr %s816, 64
          %s821 = scalar_lea.hbm %s3, %s820
          %s823 = sshll.u32 %s812, 4
          %s824 = int_to_ptr.vmem [resolvable:$true] %s823
          %826 = dma.vmem_to_hbm [thread:$0]  %s824, 256, %s821, %s809
        $region40: #{tpu_custom_call.1} parent=31 // pred_fallthru
          _
      $region32: #{tpu_custom_call.1} parent=5 // pred_fallthru
        _
      %p827 = scmp.le.s32.totalorder 2, %s15
      // Predicated region
      $region41: #{tpu_custom_call.1} parent=5 // pred_check
        %p828 = pneg %p827
      $region42: #{tpu_custom_call.1} parent=5 // pred_check_branch
        %830 = sbr.rel (%p828) target = $region44
      $region43: #{tpu_custom_call.1} parent=5 // pred_region
        %s831 = ssub.s32 %s15, 2
        // Predicated region
        $region45: #{tpu_custom_call.1} parent=43 // pred_check
          %p832 = pneg %p112
        $region46: #{tpu_custom_call.1} parent=43 // pred_check_branch
          %834 = sbr.rel (%p832) target = $region48
        $region47: #{tpu_custom_call.1} parent=43 // pred_region
          %s835 = sand.u32 %s97, 1
          %s836 = scalar_lea.sflag [#allocation4], %s835
          %s837 = sand.u32 %s97, 1
          %s838 = smul.addr %s837, 16
          %s839 = scalar_lea.vmem [#allocation5], %s838
          %840 = dma.done %s836, 256
        $region48: #{tpu_custom_call.1} parent=43 // pred_fallthru
          _
      $region44: #{tpu_custom_call.1} parent=5 // pred_fallthru
        _
    $region6: #{tpu_custom_call.1} parent=1 // loop_footer
      %s19 = sadd.s32 1, %s15
    $region7: #{tpu_custom_call.1} parent=1 // loop_footer_branch
      %14 = sbr.rel target = $region3
    $region8: #{tpu_custom_call.1} parent=1 // loop_exit
      _
    %841 = vsyncpa [#allocation3], 1
    %s842 = scalar_lea.sflag [#allocation3], 1
    %843 = vsyncpa %s842, 1
    %844 = vsyncpa [#allocation4], 1
    %s845 = scalar_lea.sflag [#allocation4], 1
    %846 = vsyncpa %s845, 1

</llo_original>
